<compile_context>
chip_gen: v6e
topology: v6e:2x2x1
jax: 0.10.0
libtpu: 0.0.40
codegen_flags: <defaults>
</compile_context>

<pallas_src>
import functools

import jax
import jax.numpy as jnp
from jax import lax
from jax.experimental import pallas as pl
from jax.experimental.pallas import tpu as pltpu


def _round_up(n: int, m: int) -> int:
    return ((n + m - 1) // m) * m


def _vmem_capacity_bytes() -> int:
    """Per-core VMEM capacity; conservative (v7x-sized) fallback."""
    try:
        return int(pltpu.get_tpu_info().vmem_capacity_bytes)
    except Exception:
        return 64 * 1024 * 1024


def fm_kernel(x_ref, v_ref, v2sum_ref, o_ref, *, tile_rows: int, batch: int):
    """One batch tile: out[i] = 0.5*(sum_j (x@V)[i,j]^2 - sum_k x[i,k]^2 * v2sum[k])."""
    x = x_ref[...]                                             # (TB, D_in), input dtype
    v = v_ref[...]                                             # (D_in, D_out), input dtype

    # (x @ V)^2 summed over the factor dim -- single MXU matmul, f32 accumulate.
    xv = jnp.dot(x, v, preferred_element_type=jnp.float32)     # (TB, D_out) f32
    t1 = jnp.sum(xv * xv, axis=1)                              # (TB,) f32

    # (x^2) @ (V^2) summed over the factor dim collapses to (x^2) . rowsum(V^2):
    # VPU multiply + XLU row reduce only -- no second MXU matmul, no V^2 tile.
    # (f32 on purpose: v5e has no bf16 VPU; the temp is accounted for in the
    #  wrapper's VMEM budget.)
    xf = x.astype(jnp.float32)
    t2 = jnp.sum((xf * xf) * v2sum_ref[...], axis=1)           # (TB,) f32

    res = 0.5 * (t1 - t2)                                      # (TB,) f32

    # Mask rows of the (possibly ragged, unpadded) last tile so garbage /
    # NaN from out-of-bounds block padding never reaches the output lanes.
    row0 = pl.program_id(0) * tile_rows
    rows = row0 + lax.broadcasted_iota(jnp.int32, (1, tile_rows), 1)   # (1, TB)
    o_ref[0, :, :] = jnp.where(rows < batch, res[None, :], 0.0)        # lane-dense store


def factorization_forward(x, factor, *, tile_b: int = 512):
    """x: (batch, D_in), factor: (D_in, D_out) -> (batch,) float32.

    Matches PyTorch Factorization.forward. Inputs may be f32 or bf16; the
    matmul accumulates in f32 and the elementwise path is computed in f32.
    """
    batch, d_in = x.shape
    d_in_f, d_out = factor.shape
    assert d_in == d_in_f, "x / factor inner dims must match"

    # rowsum(V^2), computed once outside the kernel (tiny: D_in*D_out flops).
    factor_f32 = factor.astype(jnp.float32)
    v2sum = jnp.sum(factor_f32 * factor_f32, axis=1)[None, :]          # (1, D_in) f32

    x_item = jnp.dtype(x.dtype).itemsize
    f_item = jnp.dtype(factor.dtype).itemsize

    # ---- generation-aware VMEM budget -> batch tile size -------------------
    vmem_cap = _vmem_capacity_bytes()

    # Per-batch-row footprint of the pipelined working set:
    #   2 double-buffered x rows + f32 t2 temp row + f32 (x@V) row + output.
    bytes_per_row = 2 * d_in * x_item + 4 * d_in + 4 * d_out + 8
    # Resident operands, budgeted at 2x V so the double-buffered fallback
    # (if Buffered(1) is unsupported) still fits.
    resident = 2 * d_in * d_out * f_item + 2 * d_in * 4

    budget = int(vmem_cap * 0.7) - resident
    budget = max(budget, 8 * bytes_per_row)   # floor; huge d_in -> see TODO above
    max_rows = budget // bytes_per_row
    if max_rows >= 128:
        max_rows = (max_rows // 128) * 128    # unmasked lane-dense vst
    else:
        max_rows = max(8, (max_rows // 8) * 8)

    # Ensure >=2 grid tiles for batch >= 16 so the "parallel" batch axis can be
    # sharded across both TensorCores on v7x (one extra grid step is noise on
    # single-TC v5e/v6e).
    if batch >= 16:
        half = -(-batch // 2)
        split_cap = _round_up(half, 128) if half >= 128 else _round_up(half, 8)
    else:
        split_cap = _round_up(batch, 8)

    tb = max(8, min(tile_b, max_rows, split_cap))
    tb = (tb // 128) * 128 if tb >= 128 else _round_up(tb, 8)

    num_tiles = -(-batch // tb)               # NO wrapper-side padding of x

    kernel = functools.partial(fm_kernel, tile_rows=tb, batch=batch)

    flops = num_tiles * tb * (2 * d_in * d_out + 3 * d_in + 3 * d_out)
    bytes_accessed = (batch * d_in * x_item            # x streamed once
                      + d_in * d_out * f_item          # V (resident)
                      + d_in * 4                       # rowsum(V^2)
                      + num_tiles * tb * 4)            # output
    vmem_limit = int(max(32 * 1024 * 1024,
                         min(vmem_cap * 3 // 4, 128 * 1024 * 1024)))

    def build(single_buffer_resident: bool):
        if single_buffer_resident:
            # Grid-invariant operands: one buffer instead of the default two.
            v_spec = pl.BlockSpec((d_in, d_out), lambda i: (0, 0),
                                  pipeline_mode=pl.Buffered(1))
            v2_spec = pl.BlockSpec((1, d_in), lambda i: (0, 0),
                                   pipeline_mode=pl.Buffered(1))
        else:
            v_spec = pl.BlockSpec((d_in, d_out), lambda i: (0, 0))
            v2_spec = pl.BlockSpec((1, d_in), lambda i: (0, 0))
        return pl.pallas_call(
            kernel,
            out_shape=jax.ShapeDtypeStruct((num_tiles, 1, tb), jnp.float32),
            grid_spec=pltpu.PrefetchScalarGridSpec(
                num_scalar_prefetch=0,
                grid=(num_tiles,),
                in_specs=[
                    pl.BlockSpec((tb, d_in), lambda i: (i, 0)),   # x: pipelined
                    v_spec,                                       # V: resident
                    v2_spec,                                      # rowsum(V^2): resident
                ],
                out_specs=pl.BlockSpec((1, 1, tb), lambda i: (i, 0, 0)),
            ),
            compiler_params=pltpu.CompilerParams(
                dimension_semantics=("parallel",),   # shard batch tiles across TCs
                vmem_limit_bytes=vmem_limit,
            ),
            cost_estimate=pl.CostEstimate(
                flops=int(flops), transcendentals=0,
                bytes_accessed=int(bytes_accessed)),
        )

    try:
        out = build(True)(x, factor, v2sum)
    except Exception:
        # pipeline_mode=pl.Buffered(1) not supported on this jax build:
        # fall back to default double-buffered resident operands (budgeted for).
        out = build(False)(x, factor, v2sum)

    return out.reshape(num_tiles * tb)[:batch]


if __name__ == "__main__":
    batch, input_dim, output_dim = 8, 32, 16

    key = jax.random.PRNGKey(0)
    kx, kv = jax.random.split(key)
    x = jax.random.normal(kx, (batch, input_dim), dtype=jnp.float32)
    # Deterministic parameter init, mirroring torch.randn(input_dim, output_dim)
    factor = jax.random.normal(kv, (input_dim, output_dim), dtype=jnp.float32)

    def ref_fm(xx, ff):
        return 0.5 * jnp.sum(jnp.square(xx @ ff) - (xx * xx) @ (ff * ff), axis=1)

    # f32 path
    out = factorization_forward(x, factor)
    jax.block_until_ready(out)
    assert out.shape == (batch,)
    assert jnp.allclose(out, ref_fm(x, factor), atol=1e-4, rtol=1e-4)

    # Ragged batch (exercises the unpadded, in-kernel-masked last tile path)
    batch2 = 37
    x2 = jax.random.normal(kx, (batch2, input_dim), dtype=jnp.float32)
    out2 = factorization_forward(x2, factor, tile_b=16)
    jax.block_until_ready(out2)
    assert out2.shape == (batch2,)
    assert jnp.allclose(out2, ref_fm(x2, factor), atol=1e-4, rtol=1e-4)

    # bf16 inputs (halves HBM traffic; bf16 MXU path with f32 accumulation)
    x_bf, f_bf = x.astype(jnp.bfloat16), factor.astype(jnp.bfloat16)
    out_bf = factorization_forward(x_bf, f_bf)
    jax.block_until_ready(out_bf)
    ref_bf = ref_fm(x_bf.astype(jnp.float32), f_bf.astype(jnp.float32))
    assert jnp.allclose(out_bf, ref_bf, atol=1e-2, rtol=1e-2)

    print("KERNEL_OK")
</pallas_src>

<mosaic_0001>
module attributes {stable_mosaic.version = 11 : i64} {
  func.func @fm_kernel(%arg0: i32, %arg1: memref<8x32xf32, #tpu.memory_space<vmem>>, %arg2: memref<32x16xf32, #tpu.memory_space<vmem>>, %arg3: memref<1x32xf32, #tpu.memory_space<vmem>>, %arg4: memref<1x1x8xf32, #tpu.memory_space<vmem>>) attributes {dimension_semantics = [#tpu.dimension_semantics<parallel>], iteration_bounds = array<i64: 1>, scalar_prefetch = 0 : i64, scratch_operands = 0 : i64, tpu.core_type = #tpu.core_type<tc>, window_params = [{transform_indices = @transform_0, window_bounds = array<i64: 8, 32>}, {pipeline_mode = #tpu.pipeline_mode<synchronous>, transform_indices = @transform_1, window_bounds = array<i64: 32, 16>}, {pipeline_mode = #tpu.pipeline_mode<synchronous>, transform_indices = @transform_2, window_bounds = array<i64: 1, 32>}, {transform_indices = @transform_3, window_bounds = array<i64: 1, 1, 8>}]} {
    %c0 = arith.constant 0 : index
    %c0_0 = arith.constant 0 : index
    %0 = vector.load %arg1[%c0, %c0_0] : memref<8x32xf32, #tpu.memory_space<vmem>>, vector<8x32xf32>
    %c0_1 = arith.constant 0 : index
    %c0_2 = arith.constant 0 : index
    %1 = vector.load %arg2[%c0_1, %c0_2] : memref<32x16xf32, #tpu.memory_space<vmem>>, vector<32x16xf32>
    %cst = arith.constant dense<0.000000e+00> : vector<8x16xf32>
    %2 = tpu.matmul %0, %1, %cst {dimension_numbers = #tpu.dot_dimension_numbers<[1], [0], [0], [1], [0, 0, 1, 1], [], []>} : vector<8x32xf32>, vector<32x16xf32>, vector<8x16xf32> -> vector<8x16xf32>
    %3 = arith.mulf %2, %2 : vector<8x16xf32>
    %cst_3 = arith.constant dense<0.000000e+00> : vector<8xf32>
    %4 = vector.multi_reduction <add>, %3, %cst_3 [1] : vector<8x16xf32> to vector<8xf32>
    %5 = arith.mulf %0, %0 : vector<8x32xf32>
    %c0_4 = arith.constant 0 : index
    %c0_5 = arith.constant 0 : index
    %6 = vector.load %arg3[%c0_4, %c0_5] : memref<1x32xf32, #tpu.memory_space<vmem>>, vector<1x32xf32>
    %7 = vector.broadcast %6 : vector<1x32xf32> to vector<8x32xf32>
    %8 = arith.mulf %5, %7 : vector<8x32xf32>
    %cst_6 = arith.constant dense<0.000000e+00> : vector<8xf32>
    %9 = vector.multi_reduction <add>, %8, %cst_6 [1] : vector<8x32xf32> to vector<8xf32>
    %10 = arith.subf %4, %9 : vector<8xf32>
    %cst_7 = arith.constant 5.000000e-01 : f32
    %11 = vector.broadcast %cst_7 : f32 to vector<8xf32>
    %12 = arith.mulf %11, %10 : vector<8xf32>
    %c8_i32 = arith.constant 8 : i32
    %13 = arith.muli %arg0, %c8_i32 : i32
    %14 = tpu.iota {dimensions = array<i32: 1>} : vector<1x8xi32>
    %15 = vector.broadcast %13 : i32 to vector<1x8xi32>
    %16 = arith.addi %15, %14 : vector<1x8xi32>
    %c8_i32_8 = arith.constant 8 : i32
    %17 = vector.broadcast %c8_i32_8 : i32 to vector<1x8xi32>
    %18 = arith.cmpi slt, %16, %17 : vector<1x8xi32>
    %19 = vector.shape_cast %12 : vector<8xf32> to vector<1x8xf32>
    %cst_9 = arith.constant 0.000000e+00 : f32
    %20 = vector.broadcast %cst_9 : f32 to vector<1x8xf32>
    %21 = arith.select %18, %19, %20 : vector<1x8xi1>, vector<1x8xf32>
    %c0_10 = arith.constant 0 : index
    %c0_11 = arith.constant 0 : index
    %c0_12 = arith.constant 0 : index
    %22 = vector.load %arg4[%c0_10, %c0_11, %c0_12] : memref<1x1x8xf32, #tpu.memory_space<vmem>>, vector<1x1x8xf32>
    %23 = vector.shape_cast %22 : vector<1x1x8xf32> to vector<1x8xf32>
    %24 = vector.shape_cast %21 : vector<1x8xf32> to vector<1x1x8xf32>
    tpu.vector_store %arg4[%c0_10, %c0_11, %c0_12], %24 {strides = array<i32>} : memref<1x1x8xf32, #tpu.memory_space<vmem>>, vector<1x1x8xf32>,
    return
  }
  func.func @transform_0(%arg0: i32) -> (i32, i32) {
    %c0_i32 = arith.constant 0 : i32
    %c0_i32_0 = arith.constant 0 : i32
    return %arg0, %c0_i32 : i32, i32
  }
  func.func @transform_1(%arg0: i32) -> (i32, i32) {
    %c0_i32 = arith.constant 0 : i32
    %c0_i32_0 = arith.constant 0 : i32
    %c0_i32_1 = arith.constant 0 : i32
    return %c0_i32, %c0_i32_0 : i32, i32
  }
  func.func @transform_2(%arg0: i32) -> (i32, i32) {
    %c0_i32 = arith.constant 0 : i32
    %c0_i32_0 = arith.constant 0 : i32
    %c0_i32_1 = arith.constant 0 : i32
    return %c0_i32, %c0_i32_0 : i32, i32
  }
  func.func @transform_3(%arg0: i32) -> (i32, i32, i32) {
    %c0_i32 = arith.constant 0 : i32
    %c0_i32_0 = arith.constant 0 : i32
    %c0_i32_1 = arith.constant 0 : i32
    return %arg0, %c0_i32, %c0_i32_0 : i32, i32, i32
  }
}

module attributes {stable_mosaic.version = 11 : i64} {
  func.func @fm_kernel(%arg0: i32, %arg1: memref<8x32xf32, #tpu.memory_space<vmem>>, %arg2: memref<32x16xf32, #tpu.memory_space<vmem>>, %arg3: memref<1x32xf32, #tpu.memory_space<vmem>>, %arg4: memref<1x1x8xf32, #tpu.memory_space<vmem>>) attributes {dimension_semantics = [#tpu.dimension_semantics<parallel>], iteration_bounds = array<i64: 1>, scalar_prefetch = 0 : i64, scratch_operands = 0 : i64, tpu.core_type = #tpu.core_type<tc>, window_params = [{transform_indices = @transform_0, window_bounds = array<i64: 8, 32>}, {pipeline_mode = #tpu.pipeline_mode<synchronous>, transform_indices = @transform_1, window_bounds = array<i64: 32, 16>}, {pipeline_mode = #tpu.pipeline_mode<synchronous>, transform_indices = @transform_2, window_bounds = array<i64: 1, 32>}, {transform_indices = @transform_3, window_bounds = array<i64: 1, 1, 8>}]} {
    %c0 = arith.constant 0 : index
    %c0_0 = arith.constant 0 : index
    %0 = vector.load %arg1[%c0, %c0_0] : memref<8x32xf32, #tpu.memory_space<vmem>>, vector<8x32xf32>
    %c0_1 = arith.constant 0 : index
    %c0_2 = arith.constant 0 : index
    %1 = vector.load %arg2[%c0_1, %c0_2] : memref<32x16xf32, #tpu.memory_space<vmem>>, vector<32x16xf32>
    %cst = arith.constant dense<0.000000e+00> : vector<8x16xf32>
    %2 = tpu.matmul %0, %1, %cst {dimension_numbers = #tpu.dot_dimension_numbers<[1], [0], [0], [1], [0, 0, 1, 1], [], []>} : vector<8x32xf32>, vector<32x16xf32>, vector<8x16xf32> -> vector<8x16xf32>
    %3 = arith.mulf %2, %2 : vector<8x16xf32>
    %cst_3 = arith.constant dense<0.000000e+00> : vector<8xf32>
    %4 = vector.multi_reduction <add>, %3, %cst_3 [1] : vector<8x16xf32> to vector<8xf32>
    %5 = arith.mulf %0, %0 : vector<8x32xf32>
    %c0_4 = arith.constant 0 : index
    %c0_5 = arith.constant 0 : index
    %6 = vector.load %arg3[%c0_4, %c0_5] : memref<1x32xf32, #tpu.memory_space<vmem>>, vector<1x32xf32>
    %7 = vector.broadcast %6 : vector<1x32xf32> to vector<8x32xf32>
    %8 = arith.mulf %5, %7 : vector<8x32xf32>
    %cst_6 = arith.constant dense<0.000000e+00> : vector<8xf32>
    %9 = vector.multi_reduction <add>, %8, %cst_6 [1] : vector<8x32xf32> to vector<8xf32>
    %10 = arith.subf %4, %9 : vector<8xf32>
    %cst_7 = arith.constant 5.000000e-01 : f32
    %11 = vector.broadcast %cst_7 : f32 to vector<8xf32>
    %12 = arith.mulf %11, %10 : vector<8xf32>
    %c8_i32 = arith.constant 8 : i32
    %13 = arith.muli %arg0, %c8_i32 : i32
    %14 = tpu.iota {dimensions = array<i32: 1>} : vector<1x8xi32>
    %15 = vector.broadcast %13 : i32 to vector<1x8xi32>
    %16 = arith.addi %15, %14 : vector<1x8xi32>
    %c8_i32_8 = arith.constant 8 : i32
    %17 = vector.broadcast %c8_i32_8 : i32 to vector<1x8xi32>
    %18 = arith.cmpi slt, %16, %17 : vector<1x8xi32>
    %19 = vector.shape_cast %12 : vector<8xf32> to vector<1x8xf32>
    %cst_9 = arith.constant 0.000000e+00 : f32
    %20 = vector.broadcast %cst_9 : f32 to vector<1x8xf32>
    %21 = arith.select %18, %19, %20 : vector<1x8xi1>, vector<1x8xf32>
    %c0_10 = arith.constant 0 : index
    %c0_11 = arith.constant 0 : index
    %c0_12 = arith.constant 0 : index
    %22 = vector.load %arg4[%c0_10, %c0_11, %c0_12] : memref<1x1x8xf32, #tpu.memory_space<vmem>>, vector<1x1x8xf32>
    %23 = vector.shape_cast %22 : vector<1x1x8xf32> to vector<1x8xf32>
    %24 = vector.shape_cast %21 : vector<1x8xf32> to vector<1x1x8xf32>
    tpu.vector_store %arg4[%c0_10, %c0_11, %c0_12], %24 {strides = array<i32>} : memref<1x1x8xf32, #tpu.memory_space<vmem>>, vector<1x1x8xf32>,
    return
  }
  func.func @transform_0(%arg0: i32) -> (i32, i32) {
    %c0_i32 = arith.constant 0 : i32
    %c0_i32_0 = arith.constant 0 : i32
    return %arg0, %c0_i32 : i32, i32
  }
  func.func @transform_1(%arg0: i32) -> (i32, i32) {
    %c0_i32 = arith.constant 0 : i32
    %c0_i32_0 = arith.constant 0 : i32
    %c0_i32_1 = arith.constant 0 : i32
    return %c0_i32, %c0_i32_0 : i32, i32
  }
  func.func @transform_2(%arg0: i32) -> (i32, i32) {
    %c0_i32 = arith.constant 0 : i32
    %c0_i32_0 = arith.constant 0 : i32
    %c0_i32_1 = arith.constant 0 : i32
    return %c0_i32, %c0_i32_0 : i32, i32
  }
  func.func @transform_3(%arg0: i32) -> (i32, i32, i32) {
    %c0_i32 = arith.constant 0 : i32
    %c0_i32_0 = arith.constant 0 : i32
    %c0_i32_1 = arith.constant 0 : i32
    return %arg0, %c0_i32, %c0_i32_0 : i32, i32, i32
  }
}

</mosaic_0001>

<llo_original>
// kernel: tpu_custom_call.1
$region0: #{tpu_custom_call.1}
  #allocation0 [shape = 'u32[]', space=smem, size = 0x4, offset = 0x4, fixed_abs, tag = 'smem constant byte address 0x4 - core index']
  #allocation1 [shape = 'u32[144,128]{1,0:T(1,128)}', space=vmem, size = 0x12000, scoped, tag = 'internal scratch']
  %s0 = inlined_call_operand.vmem [shape: f32[8,32], index: 0, kind: input, shape index: {}]
  %s1 = inlined_call_operand.vmem [shape: f32[32,16], index: 1, kind: input, shape index: {}]
  %s2 = inlined_call_operand.vmem [shape: f32[1,32], index: 2, kind: input, shape index: {}]
  %s3 = inlined_call_operand.hbm [shape: f32[1,1,8], index: 3, kind: output, shape index: {}]
  %s4 = sld [smem:[#allocation0]]
  $region22: #{tpu_custom_call.1} parent=0
    _
  %s6 = ssub.s32 1, %s4
  %s7 = scalar_select 0, %s6, %s4
  $region1: #{tpu_custom_call.1} parent=0
    #allocation2 [shape = 'u8[512]{0}', space=vmem, size = 0x400, scoped, tag = 'output window, operand 0, single buffered']
    #allocation3 [shape = 's32[1]{0}', space=sflag, size = 0x4, scoped, tag = 'scoped memory for tpu_custom_call.1']
    %8 = vsyncpa [#allocation3], 0
    // Predicated region
    $region2: #{tpu_custom_call.1} parent=1 // pred_check
      _
    $region3: #{tpu_custom_call.1} parent=1 // pred_check_branch
      %10 = sbr.rel (0) target = $region5
    $region4: #{tpu_custom_call.1} parent=1 // pred_region
      _
    $region5: #{tpu_custom_call.1} parent=1 // pred_fallthru
      _
    // Predicated region
    $region6: #{tpu_custom_call.1} parent=1 // pred_check
      _
    $region7: #{tpu_custom_call.1} parent=1 // pred_check_branch
      %12 = sbr.rel (0) target = $region9
    $region8: #{tpu_custom_call.1} parent=1 // pred_region
      _
    $region9: #{tpu_custom_call.1} parent=1 // pred_fallthru
      _
    // Predicated region
    $region10: #{tpu_custom_call.1} parent=1 // pred_check
      _
    $region11: #{tpu_custom_call.1} parent=1 // pred_check_branch
      %14 = sbr.rel (0) target = $region13
    $region12: #{tpu_custom_call.1} parent=1 // pred_region
      _
    $region13: #{tpu_custom_call.1} parent=1 // pred_fallthru
      _
    %v15 = vld [vmem:[%s0] sm:$0xff]
    %v16 = vld [vmem:[%s1] sm:$0xff]
    %v17 = vld [vmem:[%s1 + $0x8] sm:$0xff]
    %v18 = vld [vmem:[%s1 + $0x10] sm:$0xff]
    %v19 = vld [vmem:[%s1 + $0x18] sm:$0xff]
    %vm20 = vcmask 261120
    %v22 = vsel %vm20, %v15, 0
    %24 = vmatprep.subr.mxu0 0.0
    %25 = vmatpush1.msra.mxu0 0.0
    %26 = vmatprep.subr.mxu0 0.0
    %27 = vmatpush1.msra.mxu0 0.0
    %28 = vmatprep.subr.mxu0 0.0
    %29 = vmatpush1.msra.mxu0 0.0
    %30 = vmatprep.subr.mxu0 0.0
    %31 = vmatpush1.msra.mxu0 0.0
    %32 = vmatprep.subr.mxu0 0.0
    %33 = vmatpush1.msra.mxu0 0.0
    %34 = vmatprep.subr.mxu0 0.0
    %35 = vmatpush1.msra.mxu0 0.0
    %36 = vmatprep.subr.mxu0 0.0
    %37 = vmatpush1.msra.mxu0 0.0
    %38 = vmatprep.subr.mxu0 0.0
    %39 = vmatpush1.msra.mxu0 0.0
    %40 = vmatprep.subr.mxu0 0.0
    %41 = vmatpush1.msra.mxu0 0.0
    %42 = vmatprep.subr.mxu0 0.0
    %43 = vmatpush1.msra.mxu0 0.0
    %44 = vmatprep.subr.mxu0 0.0
    %45 = vmatpush1.msra.mxu0 0.0
    %46 = vmatprep.subr.mxu0 0.0
    %47 = vmatpush1.msra.mxu0 0.0
    %48 = vmatprep.subr.mxu0 0.0
    %49 = vmatpush1.msra.mxu0 %v19
    %50 = vmatprep.subr.mxu0 0.0
    %51 = vmatpush1.msra.mxu0 %v18
    %52 = vmatprep.subr.mxu0 0.0
    %53 = vmatpush1.msra.mxu0 %v17
    %54 = vmatprep.subr.mxu0 0.0
    %55 = vmatpush1.msra.mxu0 %v16
    %56 = vmatprep.subr.mxu0 0.0
    %57 = vmatpush2.msra.mxu0 0.0
    %58 = vmatprep.subr.mxu0 0.0
    %59 = vmatpush2.msra.mxu0 0.0
    %60 = vmatprep.subr.mxu0 0.0
    %61 = vmatpush2.msra.mxu0 0.0
    %62 = vmatprep.subr.mxu0 0.0
    %63 = vmatpush2.msra.mxu0 0.0
    %64 = vmatprep.subr.mxu0 0.0
    %65 = vmatpush2.msra.mxu0 0.0
    %66 = vmatprep.subr.mxu0 0.0
    %67 = vmatpush2.msra.mxu0 0.0
    %68 = vmatprep.subr.mxu0 0.0
    %69 = vmatpush2.msra.mxu0 0.0
    %70 = vmatprep.subr.mxu0 0.0
    %71 = vmatpush2.msra.mxu0 0.0
    %72 = vmatprep.subr.mxu0 0.0
    %73 = vmatpush2.msra.mxu0 0.0
    %74 = vmatprep.subr.mxu0 0.0
    %75 = vmatpush2.msra.mxu0 0.0
    %76 = vmatprep.subr.mxu0 0.0
    %77 = vmatpush2.msra.mxu0 0.0
    %78 = vmatprep.subr.mxu0 0.0
    %79 = vmatpush2.msra.mxu0 0.0
    %80 = vmatprep.subr.mxu0 0.0
    %81 = vmatpush2.msra.mxu0 0.0
    %82 = vmatprep.subr.mxu0 0.0
    %83 = vmatpush2.msra.mxu0 0.0
    %84 = vmatprep.subr.mxu0 0.0
    %85 = vmatpush2.msra.mxu0 0.0
    %86 = vmatprep.subr.mxu0 0.0
    %87 = vmatpush2.msra.mxu0 0.0
    %88 = vmatprep.mubr.f32.mxu0 0.0
    %89 = vmatmul.mubr.f32.gmra.mxu0 %v22
    %v90 = vpop.f32.mrf.mxu0
    %v91 = vadd.f32 0.0, %v90
    %v92 = vpop.f32.mrf.mxu0
    %93 = vdwg.mxu0
    %v94 = vmul.f32 %v91, %v91
    %vm95 = vcmask 130048
    %v96 = vsel %vm95, %v94, 0.0
    %97 = vadd.xlane.f32.xlu0 %v96
    %v98 = vpop.xlane.xlu0 %97
    %v99 = vmul.f32 %v15, %v15
    %v100 = vld [vmem:[%s2] sm:$0x1]
    %v102 = vlaneseq
    %v103 = vshrl.u32 %v102, 7
    %v104 = vsub.s32 0, %v103
    %v105 = vrot.slane %v100, %v104
    %v107 = vmul.f32 %v99, %v105
    %v108 = vsel %vm20, %v107, 0.0
    %109 = vadd.xlane.f32.xlu0 %v108
    %v110 = vpop.xlane.xlu0 %109
    %v111 = vsub.f32 %v98, %v110
    %v112 = vmul.f32 %v111, 0.5
    %s113 = smul.u32 0, 8
    %v114 = vlaneseq
    %v115 = vand.u32 %v114, 127
    %v116 = vstv %s113
    %v117 = vadd.s32 %v116, %v115
    %vm118 = vcmp.lt.s32.totalorder %v117, 8
    %v120 = vlaneseq
    %v121 = vshrl.u32 %v120, 7
    %v122 = vsub.s32 %v115, %v121
    %v123 = vrot.slane %v112, %v122
    %v125 = vsel %vm118, %v123, 0.0
    %vm126 = vcmask 57344
    %127 = vst.msk [vmem:[#allocation2] sm:$0x1] %vm126, %v125
    // Predicated region
    $region14: #{tpu_custom_call.1} parent=1 // pred_check
      _
    $region15: #{tpu_custom_call.1} parent=1 // pred_check_branch
      %129 = sbr.rel (0) target = $region17
    $region16: #{tpu_custom_call.1} parent=1 // pred_region
      %s131 = ssub.s32 16, 16
      %132 = vsyncadd [#allocation3], %s131
      %s134 = sshll.u32 [#allocation2], 4
      %s135 = int_to_ptr.vmem [resolvable:$true] %s134
      %137 = dma.vmem_to_hbm [thread:$0]  %s135, 16, %s3, [#allocation3]
    $region17: #{tpu_custom_call.1} parent=1 // pred_fallthru
      _
    // Predicated region
    $region18: #{tpu_custom_call.1} parent=1 // pred_check
      _
    $region19: #{tpu_custom_call.1} parent=1 // pred_check_branch
      %139 = sbr.rel (0) target = $region21
    $region20: #{tpu_custom_call.1} parent=1 // pred_region
      %140 = dma.done [#allocation3], 16
    $region21: #{tpu_custom_call.1} parent=1 // pred_fallthru
      _
    %141 = vsyncpa [#allocation3], 1

// kernel: tpu_custom_call.1
$region0: #{tpu_custom_call.1}
  #allocation0 [shape = 'u32[]', space=smem, size = 0x4, offset = 0x4, fixed_abs, tag = 'smem constant byte address 0x4 - core index']
  #allocation1 [shape = 'u32[144,128]{1,0:T(1,128)}', space=vmem, size = 0x12000, scoped, tag = 'internal scratch']
  %s0 = inlined_call_operand.vmem [shape: f32[8,32], index: 0, kind: input, shape index: {}]
  %s1 = inlined_call_operand.vmem [shape: f32[32,16], index: 1, kind: input, shape index: {}]
  %s2 = inlined_call_operand.vmem [shape: f32[1,32], index: 2, kind: input, shape index: {}]
  %s3 = inlined_call_operand.hbm [shape: f32[1,1,8], index: 3, kind: output, shape index: {}]
  %s4 = sld [smem:[#allocation0]]
  $region22: #{tpu_custom_call.1} parent=0
    _
  %s6 = ssub.s32 1, %s4
  %s7 = scalar_select 0, %s6, %s4
  $region1: #{tpu_custom_call.1} parent=0
    #allocation2 [shape = 'u8[512]{0}', space=vmem, size = 0x400, scoped, tag = 'output window, operand 0, single buffered']
    #allocation3 [shape = 's32[1]{0}', space=sflag, size = 0x4, scoped, tag = 'scoped memory for tpu_custom_call.1']
    %8 = vsyncpa [#allocation3], 0
    // Predicated region
    $region2: #{tpu_custom_call.1} parent=1 // pred_check
      _
    $region3: #{tpu_custom_call.1} parent=1 // pred_check_branch
      %10 = sbr.rel (0) target = $region5
    $region4: #{tpu_custom_call.1} parent=1 // pred_region
      _
    $region5: #{tpu_custom_call.1} parent=1 // pred_fallthru
      _
    // Predicated region
    $region6: #{tpu_custom_call.1} parent=1 // pred_check
      _
    $region7: #{tpu_custom_call.1} parent=1 // pred_check_branch
      %12 = sbr.rel (0) target = $region9
    $region8: #{tpu_custom_call.1} parent=1 // pred_region
      _
    $region9: #{tpu_custom_call.1} parent=1 // pred_fallthru
      _
    // Predicated region
    $region10: #{tpu_custom_call.1} parent=1 // pred_check
      _
    $region11: #{tpu_custom_call.1} parent=1 // pred_check_branch
      %14 = sbr.rel (0) target = $region13
    $region12: #{tpu_custom_call.1} parent=1 // pred_region
      _
    $region13: #{tpu_custom_call.1} parent=1 // pred_fallthru
      _
    %v15 = vld [vmem:[%s0] sm:$0xff]
    %v16 = vld [vmem:[%s1] sm:$0xff]
    %v17 = vld [vmem:[%s1 + $0x8] sm:$0xff]
    %v18 = vld [vmem:[%s1 + $0x10] sm:$0xff]
    %v19 = vld [vmem:[%s1 + $0x18] sm:$0xff]
    %vm20 = vcmask 261120
    %v22 = vsel %vm20, %v15, 0
    %24 = vmatprep.subr.mxu0 0.0
    %25 = vmatpush1.msra.mxu0 0.0
    %26 = vmatprep.subr.mxu0 0.0
    %27 = vmatpush1.msra.mxu0 0.0
    %28 = vmatprep.subr.mxu0 0.0
    %29 = vmatpush1.msra.mxu0 0.0
    %30 = vmatprep.subr.mxu0 0.0
    %31 = vmatpush1.msra.mxu0 0.0
    %32 = vmatprep.subr.mxu0 0.0
    %33 = vmatpush1.msra.mxu0 0.0
    %34 = vmatprep.subr.mxu0 0.0
    %35 = vmatpush1.msra.mxu0 0.0
    %36 = vmatprep.subr.mxu0 0.0
    %37 = vmatpush1.msra.mxu0 0.0
    %38 = vmatprep.subr.mxu0 0.0
    %39 = vmatpush1.msra.mxu0 0.0
    %40 = vmatprep.subr.mxu0 0.0
    %41 = vmatpush1.msra.mxu0 0.0
    %42 = vmatprep.subr.mxu0 0.0
    %43 = vmatpush1.msra.mxu0 0.0
    %44 = vmatprep.subr.mxu0 0.0
    %45 = vmatpush1.msra.mxu0 0.0
    %46 = vmatprep.subr.mxu0 0.0
    %47 = vmatpush1.msra.mxu0 0.0
    %48 = vmatprep.subr.mxu0 0.0
    %49 = vmatpush1.msra.mxu0 %v19
    %50 = vmatprep.subr.mxu0 0.0
    %51 = vmatpush1.msra.mxu0 %v18
    %52 = vmatprep.subr.mxu0 0.0
    %53 = vmatpush1.msra.mxu0 %v17
    %54 = vmatprep.subr.mxu0 0.0
    %55 = vmatpush1.msra.mxu0 %v16
    %56 = vmatprep.subr.mxu0 0.0
    %57 = vmatpush2.msra.mxu0 0.0
    %58 = vmatprep.subr.mxu0 0.0
    %59 = vmatpush2.msra.mxu0 0.0
    %60 = vmatprep.subr.mxu0 0.0
    %61 = vmatpush2.msra.mxu0 0.0
    %62 = vmatprep.subr.mxu0 0.0
    %63 = vmatpush2.msra.mxu0 0.0
    %64 = vmatprep.subr.mxu0 0.0
    %65 = vmatpush2.msra.mxu0 0.0
    %66 = vmatprep.subr.mxu0 0.0
    %67 = vmatpush2.msra.mxu0 0.0
    %68 = vmatprep.subr.mxu0 0.0
    %69 = vmatpush2.msra.mxu0 0.0
    %70 = vmatprep.subr.mxu0 0.0
    %71 = vmatpush2.msra.mxu0 0.0
    %72 = vmatprep.subr.mxu0 0.0
    %73 = vmatpush2.msra.mxu0 0.0
    %74 = vmatprep.subr.mxu0 0.0
    %75 = vmatpush2.msra.mxu0 0.0
    %76 = vmatprep.subr.mxu0 0.0
    %77 = vmatpush2.msra.mxu0 0.0
    %78 = vmatprep.subr.mxu0 0.0
    %79 = vmatpush2.msra.mxu0 0.0
    %80 = vmatprep.subr.mxu0 0.0
    %81 = vmatpush2.msra.mxu0 0.0
    %82 = vmatprep.subr.mxu0 0.0
    %83 = vmatpush2.msra.mxu0 0.0
    %84 = vmatprep.subr.mxu0 0.0
    %85 = vmatpush2.msra.mxu0 0.0
    %86 = vmatprep.subr.mxu0 0.0
    %87 = vmatpush2.msra.mxu0 0.0
    %88 = vmatprep.mubr.f32.mxu0 0.0
    %89 = vmatmul.mubr.f32.gmra.mxu0 %v22
    %v90 = vpop.f32.mrf.mxu0
    %v91 = vadd.f32 0.0, %v90
    %v92 = vpop.f32.mrf.mxu0
    %93 = vdwg.mxu0
    %v94 = vmul.f32 %v91, %v91
    %vm95 = vcmask 130048
    %v96 = vsel %vm95, %v94, 0.0
    %97 = vadd.xlane.f32.xlu0 %v96
    %v98 = vpop.xlane.xlu0 %97
    %v99 = vmul.f32 %v15, %v15
    %v100 = vld [vmem:[%s2] sm:$0x1]
    %v102 = vlaneseq
    %v103 = vshrl.u32 %v102, 7
    %v104 = vsub.s32 0, %v103
    %v105 = vrot.slane %v100, %v104
    %v107 = vmul.f32 %v99, %v105
    %v108 = vsel %vm20, %v107, 0.0
    %109 = vadd.xlane.f32.xlu0 %v108
    %v110 = vpop.xlane.xlu0 %109
    %v111 = vsub.f32 %v98, %v110
    %v112 = vmul.f32 %v111, 0.5
    %s113 = smul.u32 0, 8
    %v114 = vlaneseq
    %v115 = vand.u32 %v114, 127
    %v116 = vstv %s113
    %v117 = vadd.s32 %v116, %v115
    %vm118 = vcmp.lt.s32.totalorder %v117, 8
    %v120 = vlaneseq
    %v121 = vshrl.u32 %v120, 7
    %v122 = vsub.s32 %v115, %v121
    %v123 = vrot.slane %v112, %v122
    %v125 = vsel %vm118, %v123, 0.0
    %vm126 = vcmask 57344
    %127 = vst.msk [vmem:[#allocation2] sm:$0x1] %vm126, %v125
    // Predicated region
    $region14: #{tpu_custom_call.1} parent=1 // pred_check
      _
    $region15: #{tpu_custom_call.1} parent=1 // pred_check_branch
      %129 = sbr.rel (0) target = $region17
    $region16: #{tpu_custom_call.1} parent=1 // pred_region
      %s131 = ssub.s32 16, 16
      %132 = vsyncadd [#allocation3], %s131
      %s134 = sshll.u32 [#allocation2], 4
      %s135 = int_to_ptr.vmem [resolvable:$true] %s134
      %137 = dma.vmem_to_hbm [thread:$0]  %s135, 16, %s3, [#allocation3]
    $region17: #{tpu_custom_call.1} parent=1 // pred_fallthru
      _
    // Predicated region
    $region18: #{tpu_custom_call.1} parent=1 // pred_check
      _
    $region19: #{tpu_custom_call.1} parent=1 // pred_check_branch
      %139 = sbr.rel (0) target = $region21
    $region20: #{tpu_custom_call.1} parent=1 // pred_region
      %140 = dma.done [#allocation3], 16
    $region21: #{tpu_custom_call.1} parent=1 // pred_fallthru
      _
    %141 = vsyncpa [#allocation3], 1

</llo_original>
